<compile_context>
chip_gen: v6e
topology: v6e:2x2x1
jax: 0.10.0
libtpu: 0.0.40
codegen_flags: <defaults>
</compile_context>

<pallas_src>
import functools

import jax
import jax.numpy as jnp
import numpy as np
from jax.experimental import pallas as pl
from jax.experimental.pallas import tpu as pltpu


def _vmem_capacity_bytes():
    try:
        return int(pltpu.get_tpu_info().vmem_capacity_bytes)
    except Exception:
        return 64 * 1024 * 1024        # conservative (v7x)


# -------------------------------------------------------------------------
# Kernel: fused per-pixel focal loss + (8,128) partial-sum accumulation
# -------------------------------------------------------------------------
def _focal_kernel(x_ref, tgt_ref, out_ref, *, gamma, alpha, hw, rows, p_inner,
                  need_mask):
    pi = pl.program_id(2)              # inner pixel-tile index (reduction axis)

    @pl.when(pi == 0)
    def _():
        out_ref[...] = jnp.zeros_like(out_ref)

    C = x_ref.shape[0]
    tgt = tgt_ref[...]                                   # (rows, 128) int32

    # ---- channel-unrolled log-softmax gathered at the target class --------
    m = x_ref[0].astype(jnp.float32)                     # (rows, 128)
    for c in range(1, C):
        m = jnp.maximum(m, x_ref[c].astype(jnp.float32))

    denom = None
    sel = None
    for c in range(C):
        sh = x_ref[c].astype(jnp.float32) - m            # (rows, 128)
        e = jnp.exp(sh)
        denom = e if denom is None else denom + e
        hit = tgt == c
        sel = jnp.where(hit, sh, 0.0) if sel is None else jnp.where(hit, sh, sel)

    logpt = sel - jnp.log(denom)                         # (rows, 128)
    pt = jnp.exp(logpt)                                  # matches torch: pt before alpha

    if alpha is not None:                                # static per-class weights
        at = jnp.zeros_like(logpt)
        for c in range(C):
            at = jnp.where(tgt == c, jnp.float32(alpha[c]), at)
        logpt = logpt * at

    if float(gamma) == int(gamma) and gamma >= 0:
        focal = jax.lax.integer_pow(1.0 - pt, int(gamma))   # cheap VPU multiplies
    else:
        focal = jnp.maximum(1.0 - pt, 0.0) ** gamma         # clamp fp round-off
    loss = -focal * logpt                                   # (rows, 128)

    if need_mask:
        # Mask padded / out-of-bounds pixels via global pixel index (select is
        # robust even if garbage reads produce NaN/Inf in those lanes).
        base = (pl.program_id(1) * p_inner + pi) * (rows * 128)
        ridx = jax.lax.broadcasted_iota(jnp.int32, (rows, 128), 0)
        lidx = jax.lax.broadcasted_iota(jnp.int32, (rows, 128), 1)
        loss = jnp.where(base + ridx * 128 + lidx < hw, loss, 0.0)

    # Sublane-grouped reduction (layout-free): (rows,128)->(rows//8,8,128)->(8,128)
    out_ref[...] += jnp.sum(loss.reshape(rows // 8, 8, 128), axis=0)


def _choose_rows(C, hw_blocks, esize, g):
    """Rows (of 128 pixels) per tile under a generation-aware VMEM budget."""
    budget = _vmem_capacity_bytes() // 4
    per_row = 2 * 128 * (C * esize + 4)      # double-buffered logits + int32 targets
    cap = budget // per_row
    cap = max(g, min(256, (cap // g) * g))   # up to 32768 pixels per tile
    if hw_blocks <= cap:
        return hw_blocks                     # single tile covers the image
    best = g
    r = cap
    while r >= g:                            # prefer an exact divisor: no ragged tile
        if hw_blocks % r == 0:
            best = r
            break
        r -= g
    return best if best >= 64 else cap       # else ragged last tile, masked in-kernel


# -------------------------------------------------------------------------
# Python wrapper mirroring FocalLoss.forward
# -------------------------------------------------------------------------
def focal_loss(logits, target, gamma=2.0, alpha=None, size_average=True):
    """
    logits : (N, C, *spatial) float logits (e.g. NCHW), or (B, C)
    target : (N, *spatial) integer class labels in [0, C)
    """
    logits = jnp.asarray(logits)
    target = jnp.asarray(target)

    C = int(logits.shape[1])
    if logits.ndim == 2:
        # (B, C) classification: fold the batch into the pixel axis.
        N_img, HW = 1, int(logits.shape[0])
        x = logits.T.reshape(1, C, HW)
        t = target.reshape(1, HW)
    else:
        N_img = int(logits.shape[0])
        HW = int(np.prod(logits.shape[2:]))
        x = logits.reshape(N_img, C, HW)
        t = target.reshape(N_img, HW)
    t = t.astype(jnp.int32)

    # Static per-class alpha weights baked into the kernel (no extra DMA stream).
    if alpha is None:
        alpha_t = None
    elif isinstance(alpha, (float, int)) and not isinstance(alpha, bool):
        alpha_t = (float(alpha), 1.0 - float(alpha))
    else:
        alpha_t = tuple(float(a) for a in np.asarray(alpha).reshape(-1))
    if alpha_t is not None and len(alpha_t) != C:
        raise ValueError(f"alpha must have {C} entries, got {len(alpha_t)}")

    esize = jnp.dtype(logits.dtype).itemsize
    g = 8 * max(1, 4 // max(1, esize))       # sublane granule: 8 f32 / 16 bf16 / 32 int8
    align = 128 * g

    # Pad only to the lane/sublane granule (not to a whole tile).
    HWp = -(-HW // align) * align
    if HWp != HW:
        x = jnp.pad(x, ((0, 0), (0, 0), (0, HWp - HW)))
        t = jnp.pad(t, ((0, 0), (0, HWp - HW)))
    hw_blocks = HWp // 128

    # Pixel-dense layout: pixels fill both sublanes and lanes.
    x = x.reshape(N_img, C, hw_blocks, 128)
    t = t.reshape(N_img, hw_blocks, 128)

    rows = _choose_rows(C, hw_blocks, esize, g)
    num_ptiles = -(-hw_blocks // rows)
    if num_ptiles == 1 and rows >= 2 * g:    # give a 2nd TensorCore (v7x) some work
        rows = -(-(rows // 2) // g) * g
        num_ptiles = -(-hw_blocks // rows)
    if num_ptiles % 2 == 0:
        p_outer, p_inner = 2, num_ptiles // 2
    else:
        p_outer, p_inner = 1, num_ptiles
    need_mask = (num_ptiles * rows * 128) != HW

    kernel = functools.partial(
        _focal_kernel, gamma=gamma, alpha=alpha_t, hw=HW,
        rows=rows, p_inner=p_inner, need_mask=need_mask)

    block_bytes = rows * 128 * (C * esize + 4)
    vmem_limit = int(min(_vmem_capacity_bytes() // 2,
                         max(16 * 1024 * 1024, 8 * block_bytes)))
    covered = N_img * num_ptiles * rows * 128

    out = pl.pallas_call(
        kernel,
        out_shape=jax.ShapeDtypeStruct((N_img, p_outer, 8, 128), jnp.float32),
        grid_spec=pltpu.PrefetchScalarGridSpec(
            num_scalar_prefetch=0,
            grid=(N_img, p_outer, p_inner),
            in_specs=[
                pl.BlockSpec((None, C, rows, 128),
                             lambda n, po, pi: (n, 0, po * p_inner + pi, 0)),
                pl.BlockSpec((None, rows, 128),
                             lambda n, po, pi: (n, po * p_inner + pi, 0)),
            ],
            out_specs=pl.BlockSpec((None, None, 8, 128),
                                   lambda n, po, pi: (n, po, 0, 0)),
        ),
        compiler_params=pltpu.CompilerParams(
            dimension_semantics=("parallel", "parallel", "arbitrary"),
            vmem_limit_bytes=vmem_limit,
        ),
        cost_estimate=pl.CostEstimate(
            flops=int(covered * (8 * C + 14)),
            transcendentals=int(covered * (C + 2)),
            bytes_accessed=int(N_img * hw_blocks * 128 * (C * esize + 4)
                               + N_img * p_outer * 8 * 128 * 4),
        ),
    )(x, t)

    total = jnp.sum(out)
    if size_average:
        return total / (N_img * HW)     # mean over all real pixels
    return total


# -------------------------------------------------------------------------
if __name__ == "__main__":
    key = jax.random.PRNGKey(0)
    k1, k2, k3, k4, k5, k6 = jax.random.split(key, 6)

    # ---- pure-JAX reference mirroring the PyTorch forward ----
    def focal_ref(lg, tg, gamma=2.0, alpha_vec=None, size_average=True):
        lp = jax.nn.log_softmax(lg.astype(jnp.float32), axis=1)
        logpt = jnp.take_along_axis(lp, tg[:, None].astype(jnp.int32), axis=1)[:, 0]
        pt = jnp.exp(logpt)
        if alpha_vec is not None:
            at = jnp.asarray(alpha_vec, jnp.float32)[tg]
            logpt = logpt * at
        l = -((1.0 - pt) ** gamma) * logpt
        return jnp.mean(l) if size_average else jnp.sum(l)

    # Primary case: NCHW logits as in the module docstring.
    N, C, H, W = 2, 4, 16, 16
    logits = jax.random.normal(k1, (N, C, H, W), jnp.float32)
    target = jax.random.randint(k2, (N, H, W), 0, C, jnp.int32)

    loss = focal_loss(logits, target, gamma=2, alpha=None, size_average=True)
    jax.block_until_ready(loss)
    ref = focal_ref(logits, target, gamma=2.0)
    assert np.allclose(np.asarray(loss), np.asarray(ref), rtol=1e-5, atol=1e-6), (loss, ref)

    # Non-128-multiple spatial size exercises the masked-tail path; sum reduction.
    H2, W2 = 7, 9
    logits2 = jax.random.normal(k3, (N, C, H2, W2), jnp.float32)
    target2 = jax.random.randint(k4, (N, H2, W2), 0, C, jnp.int32)
    loss2 = focal_loss(logits2, target2, gamma=2, alpha=None, size_average=False)
    jax.block_until_ready(loss2)
    ref2 = focal_ref(logits2, target2, gamma=2.0, size_average=False)
    assert np.allclose(np.asarray(loss2), np.asarray(ref2), rtol=1e-5, atol=1e-5), (loss2, ref2)

    # Per-class alpha weighting path.
    alpha = [0.1, 0.2, 0.3, 0.4]
    loss3 = focal_loss(logits, target, gamma=2, alpha=alpha, size_average=True)
    jax.block_until_ready(loss3)
    ref3 = focal_ref(logits, target, gamma=2.0, alpha_vec=jnp.asarray(alpha, jnp.float32))
    assert np.allclose(np.asarray(loss3), np.asarray(ref3), rtol=1e-5, atol=1e-6), (loss3, ref3)

    # Larger spatial size: multi-tile grid with the 2-way parallel pixel split.
    H3, W3 = 64, 64
    logits4 = jax.random.normal(k5, (N, C, H3, W3), jnp.float32)
    target4 = jax.random.randint(k6, (N, H3, W3), 0, C, jnp.int32)
    loss4 = focal_loss(logits4, target4, gamma=2, alpha=None, size_average=True)
    jax.block_until_ready(loss4)
    ref4 = focal_ref(logits4, target4, gamma=2.0)
    assert np.allclose(np.asarray(loss4), np.asarray(ref4), rtol=1e-5, atol=1e-6), (loss4, ref4)

    # bf16 logits feed (halved DMA bytes); math still runs in f32 in-kernel.
    logits_bf16 = logits.astype(jnp.bfloat16)
    loss5 = focal_loss(logits_bf16, target, gamma=2, alpha=None, size_average=True)
    jax.block_until_ready(loss5)
    ref5 = focal_ref(logits_bf16.astype(jnp.float32), target, gamma=2.0)
    assert np.allclose(np.asarray(loss5), np.asarray(ref5), rtol=1e-5, atol=1e-5), (loss5, ref5)

    print("KERNEL_OK")
</pallas_src>

<mosaic_0001>
module attributes {stable_mosaic.version = 11 : i64} {
  func.func @_focal_kernel(%arg0: i32, %arg1: i32, %arg2: i32, %arg3: memref<1x4x8x128xf32, #tpu.memory_space<vmem>>, %arg4: memref<1x8x128xi32, #tpu.memory_space<vmem>>, %arg5: memref<1x1x8x128xf32, #tpu.memory_space<vmem>>) attributes {dimension_semantics = [#tpu.dimension_semantics<parallel>, #tpu.dimension_semantics<parallel>, #tpu.dimension_semantics<arbitrary>], iteration_bounds = array<i64: 2, 1, 1>, scalar_prefetch = 0 : i64, scratch_operands = 0 : i64, tpu.core_type = #tpu.core_type<tc>, window_params = [{transform_indices = @transform_0, window_bounds = array<i64: 1, 4, 8, 128>}, {transform_indices = @transform_1, window_bounds = array<i64: 1, 8, 128>}, {transform_indices = @transform_2, window_bounds = array<i64: 1, 1, 8, 128>}]} {
    %c0_i32 = arith.constant 0 : i32
    %0 = arith.cmpi eq, %arg2, %c0_i32 : i32
    %1 = arith.extui %0 : i1 to i32
    %c0_i32_0 = arith.constant 0 : i32
    %2 = arith.cmpi ne, %1, %c0_i32_0 : i32
    scf.if %2 {
      %cst_46 = arith.constant 0.000000e+00 : f32
      %79 = vector.broadcast %cst_46 : f32 to vector<8x128xf32>
      %c0_47 = arith.constant 0 : index
      %c0_48 = arith.constant 0 : index
      %c0_49 = arith.constant 0 : index
      %c0_50 = arith.constant 0 : index
      %80 = vector.load %arg5[%c0_47, %c0_48, %c0_49, %c0_50] : memref<1x1x8x128xf32, #tpu.memory_space<vmem>>, vector<1x1x8x128xf32>
      %81 = vector.shape_cast %80 : vector<1x1x8x128xf32> to vector<8x128xf32>
      %82 = vector.shape_cast %79 : vector<8x128xf32> to vector<1x1x8x128xf32>
      tpu.vector_store %arg5[%c0_47, %c0_48, %c0_49, %c0_50], %82 {strides = array<i32>} : memref<1x1x8x128xf32, #tpu.memory_space<vmem>>, vector<1x1x8x128xf32>,
    } else {
    }
    %c0 = arith.constant 0 : index
    %c0_1 = arith.constant 0 : index
    %c0_2 = arith.constant 0 : index
    %3 = vector.load %arg4[%c0, %c0_1, %c0_2] : memref<1x8x128xi32, #tpu.memory_space<vmem>>, vector<1x8x128xi32>
    %4 = vector.shape_cast %3 : vector<1x8x128xi32> to vector<8x128xi32>
    %c0_3 = arith.constant 0 : index
    %c0_4 = arith.constant 0 : index
    %c0_5 = arith.constant 0 : index
    %c0_6 = arith.constant 0 : index
    %5 = vector.load %arg3[%c0_3, %c0_4, %c0_5, %c0_6] : memref<1x4x8x128xf32, #tpu.memory_space<vmem>>, vector<1x1x8x128xf32>
    %6 = vector.shape_cast %5 : vector<1x1x8x128xf32> to vector<8x128xf32>
    %c0_7 = arith.constant 0 : index
    %c1 = arith.constant 1 : index
    %c0_8 = arith.constant 0 : index
    %c0_9 = arith.constant 0 : index
    %7 = vector.load %arg3[%c0_7, %c1, %c0_8, %c0_9] : memref<1x4x8x128xf32, #tpu.memory_space<vmem>>, vector<1x1x8x128xf32>
    %8 = vector.shape_cast %7 : vector<1x1x8x128xf32> to vector<8x128xf32>
    %9 = arith.maximumf %6, %8 : vector<8x128xf32>
    %c0_10 = arith.constant 0 : index
    %c2 = arith.constant 2 : index
    %c0_11 = arith.constant 0 : index
    %c0_12 = arith.constant 0 : index
    %10 = vector.load %arg3[%c0_10, %c2, %c0_11, %c0_12] : memref<1x4x8x128xf32, #tpu.memory_space<vmem>>, vector<1x1x8x128xf32>
    %11 = vector.shape_cast %10 : vector<1x1x8x128xf32> to vector<8x128xf32>
    %12 = arith.maximumf %9, %11 : vector<8x128xf32>
    %c0_13 = arith.constant 0 : index
    %c3 = arith.constant 3 : index
    %c0_14 = arith.constant 0 : index
    %c0_15 = arith.constant 0 : index
    %13 = vector.load %arg3[%c0_13, %c3, %c0_14, %c0_15] : memref<1x4x8x128xf32, #tpu.memory_space<vmem>>, vector<1x1x8x128xf32>
    %14 = vector.shape_cast %13 : vector<1x1x8x128xf32> to vector<8x128xf32>
    %15 = arith.maximumf %12, %14 : vector<8x128xf32>
    %c0_16 = arith.constant 0 : index
    %c0_17 = arith.constant 0 : index
    %c0_18 = arith.constant 0 : index
    %c0_19 = arith.constant 0 : index
    %16 = vector.load %arg3[%c0_16, %c0_17, %c0_18, %c0_19] : memref<1x4x8x128xf32, #tpu.memory_space<vmem>>, vector<1x1x8x128xf32>
    %17 = vector.shape_cast %16 : vector<1x1x8x128xf32> to vector<8x128xf32>
    %18 = arith.subf %17, %15 : vector<8x128xf32>
    %19 = math.exp %18 : vector<8x128xf32>
    %c0_i32_20 = arith.constant 0 : i32
    %20 = vector.broadcast %c0_i32_20 : i32 to vector<8x128xi32>
    %21 = arith.cmpi eq, %4, %20 : vector<8x128xi32>
    %cst = arith.constant 0.000000e+00 : f32
    %22 = vector.broadcast %cst : f32 to vector<8x128xf32>
    %23 = arith.select %21, %18, %22 : vector<8x128xi1>, vector<8x128xf32>
    %c0_21 = arith.constant 0 : index
    %c1_22 = arith.constant 1 : index
    %c0_23 = arith.constant 0 : index
    %c0_24 = arith.constant 0 : index
    %24 = vector.load %arg3[%c0_21, %c1_22, %c0_23, %c0_24] : memref<1x4x8x128xf32, #tpu.memory_space<vmem>>, vector<1x1x8x128xf32>
    %25 = vector.shape_cast %24 : vector<1x1x8x128xf32> to vector<8x128xf32>
    %26 = arith.subf %25, %15 : vector<8x128xf32>
    %27 = math.exp %26 : vector<8x128xf32>
    %28 = arith.addf %19, %27 : vector<8x128xf32>
    %c1_i32 = arith.constant 1 : i32
    %29 = vector.broadcast %c1_i32 : i32 to vector<8x128xi32>
    %30 = arith.cmpi eq, %4, %29 : vector<8x128xi32>
    %31 = arith.select %30, %26, %23 : vector<8x128xi1>, vector<8x128xf32>
    %c0_25 = arith.constant 0 : index
    %c2_26 = arith.constant 2 : index
    %c0_27 = arith.constant 0 : index
    %c0_28 = arith.constant 0 : index
    %32 = vector.load %arg3[%c0_25, %c2_26, %c0_27, %c0_28] : memref<1x4x8x128xf32, #tpu.memory_space<vmem>>, vector<1x1x8x128xf32>
    %33 = vector.shape_cast %32 : vector<1x1x8x128xf32> to vector<8x128xf32>
    %34 = arith.subf %33, %15 : vector<8x128xf32>
    %35 = math.exp %34 : vector<8x128xf32>
    %36 = arith.addf %28, %35 : vector<8x128xf32>
    %c2_i32 = arith.constant 2 : i32
    %37 = vector.broadcast %c2_i32 : i32 to vector<8x128xi32>
    %38 = arith.cmpi eq, %4, %37 : vector<8x128xi32>
    %39 = arith.select %38, %34, %31 : vector<8x128xi1>, vector<8x128xf32>
    %c0_29 = arith.constant 0 : index
    %c3_30 = arith.constant 3 : index
    %c0_31 = arith.constant 0 : index
    %c0_32 = arith.constant 0 : index
    %40 = vector.load %arg3[%c0_29, %c3_30, %c0_31, %c0_32] : memref<1x4x8x128xf32, #tpu.memory_space<vmem>>, vector<1x1x8x128xf32>
    %41 = vector.shape_cast %40 : vector<1x1x8x128xf32> to vector<8x128xf32>
    %42 = arith.subf %41, %15 : vector<8x128xf32>
    %43 = math.exp %42 : vector<8x128xf32>
    %44 = arith.addf %36, %43 : vector<8x128xf32>
    %c3_i32 = arith.constant 3 : i32
    %45 = vector.broadcast %c3_i32 : i32 to vector<8x128xi32>
    %46 = arith.cmpi eq, %4, %45 : vector<8x128xi32>
    %47 = arith.select %46, %42, %39 : vector<8x128xi1>, vector<8x128xf32>
    %48 = math.log %44 : vector<8x128xf32>
    %49 = arith.subf %47, %48 : vector<8x128xf32>
    %50 = math.exp %49 : vector<8x128xf32>
    %cst_33 = arith.constant 1.000000e+00 : f32
    %51 = vector.broadcast %cst_33 : f32 to vector<8x128xf32>
    %52 = arith.subf %51, %50 : vector<8x128xf32>
    %53 = arith.mulf %52, %52 : vector<8x128xf32>
    %cst_34 = arith.constant 0.000000e+00 : f32
    %54 = vector.broadcast %cst_34 : f32 to vector<8x128xf32>
    %55 = arith.subf %54, %53 : vector<8x128xf32>
    %56 = arith.mulf %55, %49 : vector<8x128xf32>
    %c1_i32_35 = arith.constant 1 : i32
    %57 = arith.muli %arg1, %c1_i32_35 : i32
    %58 = arith.addi %57, %arg2 : i32
    %c1024_i32 = arith.constant 1024 : i32
    %59 = arith.muli %58, %c1024_i32 : i32
    %60 = tpu.iota {dimensions = array<i32: 0>} : vector<8x128xi32>
    %61 = tpu.iota {dimensions = array<i32: 1>} : vector<8x128xi32>
    %c128_i32 = arith.constant 128 : i32
    %62 = vector.broadcast %c128_i32 : i32 to vector<8x128xi32>
    %63 = arith.muli %60, %62 : vector<8x128xi32>
    %64 = vector.broadcast %59 : i32 to vector<8x128xi32>
    %65 = arith.addi %64, %63 : vector<8x128xi32>
    %66 = arith.addi %65, %61 : vector<8x128xi32>
    %c256_i32 = arith.constant 256 : i32
    %67 = vector.broadcast %c256_i32 : i32 to vector<8x128xi32>
    %68 = arith.cmpi slt, %66, %67 : vector<8x128xi32>
    %cst_36 = arith.constant 0.000000e+00 : f32
    %69 = vector.broadcast %cst_36 : f32 to vector<8x128xf32>
    %70 = arith.select %68, %56, %69 : vector<8x128xi1>, vector<8x128xf32>
    %c0_37 = arith.constant 0 : index
    %c0_38 = arith.constant 0 : index
    %c0_39 = arith.constant 0 : index
    %c0_40 = arith.constant 0 : index
    %71 = vector.load %arg5[%c0_37, %c0_38, %c0_39, %c0_40] : memref<1x1x8x128xf32, #tpu.memory_space<vmem>>, vector<1x1x8x128xf32>
    %72 = vector.shape_cast %71 : vector<1x1x8x128xf32> to vector<8x128xf32>
    %73 = vector.shape_cast %70 : vector<8x128xf32> to vector<1x8x128xf32>
    %cst_41 = arith.constant dense<0.000000e+00> : vector<8x128xf32>
    %74 = vector.multi_reduction <add>, %73, %cst_41 [0] : vector<1x8x128xf32> to vector<8x128xf32>
    %75 = arith.addf %72, %74 : vector<8x128xf32>
    %c0_42 = arith.constant 0 : index
    %c0_43 = arith.constant 0 : index
    %c0_44 = arith.constant 0 : index
    %c0_45 = arith.constant 0 : index
    %76 = vector.load %arg5[%c0_42, %c0_43, %c0_44, %c0_45] : memref<1x1x8x128xf32, #tpu.memory_space<vmem>>, vector<1x1x8x128xf32>
    %77 = vector.shape_cast %76 : vector<1x1x8x128xf32> to vector<8x128xf32>
    %78 = vector.shape_cast %75 : vector<8x128xf32> to vector<1x1x8x128xf32>
    tpu.vector_store %arg5[%c0_42, %c0_43, %c0_44, %c0_45], %78 {strides = array<i32>} : memref<1x1x8x128xf32, #tpu.memory_space<vmem>>, vector<1x1x8x128xf32>,
    return
  }
  func.func @transform_0(%arg0: i32, %arg1: i32, %arg2: i32) -> (i32, i32, i32, i32) {
    %c1_i32 = arith.constant 1 : i32
    %0 = arith.muli %arg1, %c1_i32 : i32
    %1 = arith.addi %0, %arg2 : i32
    %c0_i32 = arith.constant 0 : i32
    %c0_i32_0 = arith.constant 0 : i32
    %c0_i32_1 = arith.constant 0 : i32
    return %arg0, %c0_i32, %1, %c0_i32_0 : i32, i32, i32, i32
  }
  func.func @transform_1(%arg0: i32, %arg1: i32, %arg2: i32) -> (i32, i32, i32) {
    %c1_i32 = arith.constant 1 : i32
    %0 = arith.muli %arg1, %c1_i32 : i32
    %1 = arith.addi %0, %arg2 : i32
    %c0_i32 = arith.constant 0 : i32
    %c0_i32_0 = arith.constant 0 : i32
    return %arg0, %1, %c0_i32 : i32, i32, i32
  }
  func.func @transform_2(%arg0: i32, %arg1: i32, %arg2: i32) -> (i32, i32, i32, i32) {
    %c0_i32 = arith.constant 0 : i32
    %c0_i32_0 = arith.constant 0 : i32
    %c0_i32_1 = arith.constant 0 : i32
    return %arg0, %arg1, %c0_i32, %c0_i32_0 : i32, i32, i32, i32
  }
}

</mosaic_0001>

<llo_original>
// kernel: tpu_custom_call.1
$region0: #{tpu_custom_call.1}
  #allocation0 [shape = 'u32[]', space=smem, size = 0x4, offset = 0x4, fixed_abs, tag = 'smem constant byte address 0x4 - core index']
  #allocation1 [shape = 'u32[144,128]{1,0:T(1,128)}', space=vmem, size = 0x12000, scoped, tag = 'internal scratch']
  %s0 = inlined_call_operand.hbm [shape: f32[2,4,8,128], index: 0, kind: input, shape index: {}]
  %s1 = inlined_call_operand.hbm [shape: s32[2,8,128], index: 1, kind: input, shape index: {}]
  %s2 = inlined_call_operand.hbm [shape: f32[2,1,8,128], index: 2, kind: output, shape index: {}]
  %s3 = sld [smem:[#allocation0]]
  $region53: #{tpu_custom_call.1} parent=0
    _
  %s5 = ssub.s32 1, %s3
  %s6 = scalar_select 0, %s5, %s3
  $region1: #{tpu_custom_call.1} parent=0
    #allocation2 [shape = 'u8[32768]{0}', space=vmem, size = 0x8000, scoped, tag = 'input window, operand 0']
    #allocation3 [shape = 's32[2]{0}', space=sflag, size = 0x8, scoped, tag = 'scoped memory for tpu_custom_call.1']
    #allocation4 [shape = 's32[2]{0}', space=sflag, size = 0x8, scoped, tag = 'scoped memory for tpu_custom_call.1']
    #allocation5 [shape = 'u8[8192]{0}', space=vmem, size = 0x2000, scoped, tag = 'input window, operand 1']
    #allocation6 [shape = 's32[2]{0}', space=sflag, size = 0x8, scoped, tag = 'scoped memory for tpu_custom_call.1']
    #allocation7 [shape = 'u8[8192]{0}', space=vmem, size = 0x2000, scoped, tag = 'output window, operand 0']
    %7 = vsyncpa [#allocation3], 0
    %s8 = scalar_lea.sflag [#allocation3], 1
    %9 = vsyncpa %s8, 0
    %10 = vsyncpa [#allocation6], 0
    %s11 = scalar_lea.sflag [#allocation6], 1
    %12 = vsyncpa %s11, 0
    %13 = vsyncpa [#allocation4], 0
    %s14 = scalar_lea.sflag [#allocation4], 1
    %15 = vsyncpa %s14, 0
    loop: start=0, step=1, limit=4
    $region2: #{tpu_custom_call.1} parent=1 // loop_pre_header
      _
    $region3: #{tpu_custom_call.1} parent=1 // loop_header
      %s17 = sphi 0, %s21
      %p18 = scmp.ge.s32.totalorder %s17, 4
      %s24 = sphi 0, %s43
      %s25 = sphi 0, %s39
      %s26 = sphi 0, %s35
      %s27 = sphi 0, %s24
      %s28 = sphi 0, %s25
      %s29 = sphi 0, %s26
      %s30 = sphi 0, %s27
      %s31 = sphi 0, %s28
      %s32 = sphi 0, %s29
      %s50 = sphi 0, %s52
      %s53 = sphi 0, %s50
      %s54 = sphi 0, %s53
      %s70 = sphi 0, %s54
      %s80 = sphi 0, %s82
      %s83 = sphi 0, %s80
      %s84 = sphi 0, %s83
      %s100 = sphi 0, %s84
      %s108 = sphi 0, %s110
      %s111 = sphi 0, %s108
      %s112 = sphi 0, %s111
      %s128 = sphi 0, %s112
    $region4: #{tpu_custom_call.1} parent=1 // loop_header_branch
      %20 = sbr.rel (%p18) target = $region8
    $region5: #{tpu_custom_call.1} parent=1 // loop_body
      %s22 = ssub.s32 %s17, 1
      %s23 = ssub.s32 %s17, 2
      %s33 = sadd.s32 1, %s26
      %p34 = scmp.ge.s32.totalorder %s33, 1
      %s35 = scalar_select %p34, 0, %s33
      %s36 = sadd.s32 1, %s25
      %s37 = scalar_select %p34, %s36, %s25
      %p38 = scmp.ge.s32.totalorder %s37, 1
      %s39 = scalar_select %p38, 0, %s37
      %s40 = sadd.s32 1, %s24
      %s41 = scalar_select %p38, %s40, %s24
      %p42 = scmp.ge.s32.totalorder %s41, 2
      %s43 = scalar_select %p42, 0, %s41
      %s44 = sadd.s32 %s25, %s26
      %s45 = sadd.s32 %s39, %s35
      %s46 = ssub.s32 %s24, %s43
      %s47 = ssub.s32 %s44, %s45
      %s48 = sor.u32 %s46, %s47
      %p49 = scmp.eq.s32.totalorder %s48, 0
      %s51 = sadd.s32 %s50, 1
      %s52 = scalar_select %p49, %s50, %s51
      %p55 = pneg %p49
      %p56 = scmp.eq.s32.totalorder %s17, 1
      %p57 = por %p55, %p56
      %p58 = scmp.ne.s32.totalorder %s50, %s53
      %p59 = scmp.eq.s32.totalorder %s17, 0
      %p60 = por %p58, %p59
      %p61 = scmp.ne.s32.totalorder %s50, %s53
      %p62 = scmp.eq.s32.totalorder %s22, 1
      %p63 = por %p61, %p62
      %p64 = scmp.ne.s32.totalorder %s53, %s54
      %p65 = scmp.eq.s32.totalorder %s22, 0
      %p66 = por %p64, %p65
      %p67 = scmp.ne.s32.totalorder %s53, %s54
      %p68 = scmp.eq.s32.totalorder %s23, 1
      %p69 = por %p67, %p68
      %p71 = scmp.ne.s32.totalorder %s54, %s70
      %p72 = scmp.eq.s32.totalorder %s23, 0
      %p73 = por %p71, %p72
      %s74 = sadd.s32 %s25, %s26
      %s75 = sadd.s32 %s39, %s35
      %s76 = ssub.s32 %s24, %s43
      %s77 = ssub.s32 %s74, %s75
      %s78 = sor.u32 %s76, %s77
      %p79 = scmp.eq.s32.totalorder %s78, 0
      %s81 = sadd.s32 %s80, 1
      %s82 = scalar_select %p79, %s80, %s81
      %p85 = pneg %p79
      %p86 = scmp.eq.s32.totalorder %s17, 1
      %p87 = por %p85, %p86
      %p88 = scmp.ne.s32.totalorder %s80, %s83
      %p89 = scmp.eq.s32.totalorder %s17, 0
      %p90 = por %p88, %p89
      %p91 = scmp.ne.s32.totalorder %s80, %s83
      %p92 = scmp.eq.s32.totalorder %s22, 1
      %p93 = por %p91, %p92
      %p94 = scmp.ne.s32.totalorder %s83, %s84
      %p95 = scmp.eq.s32.totalorder %s22, 0
      %p96 = por %p94, %p95
      %p97 = scmp.ne.s32.totalorder %s83, %s84
      %p98 = scmp.eq.s32.totalorder %s23, 1
      %p99 = por %p97, %p98
      %p101 = scmp.ne.s32.totalorder %s84, %s100
      %p102 = scmp.eq.s32.totalorder %s23, 0
      %p103 = por %p101, %p102
      %s104 = ssub.s32 %s24, %s43
      %s105 = ssub.s32 %s25, %s39
      %s106 = sor.u32 %s104, %s105
      %p107 = scmp.eq.s32.totalorder %s106, 0
      %s109 = sadd.s32 %s108, 1
      %s110 = scalar_select %p107, %s108, %s109
      %p113 = pneg %p107
      %p114 = scmp.eq.s32.totalorder %s17, 1
      %p115 = por %p113, %p114
      %p116 = scmp.ne.s32.totalorder %s108, %s111
      %p117 = scmp.eq.s32.totalorder %s17, 0
      %p118 = por %p116, %p117
      %p119 = scmp.ne.s32.totalorder %s108, %s111
      %p120 = scmp.eq.s32.totalorder %s22, 1
      %p121 = por %p119, %p120
      %p122 = scmp.ne.s32.totalorder %s111, %s112
      %p123 = scmp.eq.s32.totalorder %s22, 0
      %p124 = por %p122, %p123
      %p125 = scmp.ne.s32.totalorder %s111, %s112
      %p126 = scmp.eq.s32.totalorder %s23, 1
      %p127 = por %p125, %p126
      %p129 = scmp.ne.s32.totalorder %s112, %s128
      %p130 = scmp.eq.s32.totalorder %s23, 0
      %p131 = por %p129, %p130
      %p132 = scmp.le.s32.totalorder 1, %s17
      %p133 = scmp.lt.s32.totalorder %s17, 3
      %p134 = pnand %p132, %p133
      %p135 = pneg %p134
      // Predicated region
      $region9: #{tpu_custom_call.1} parent=5 // pred_check
        _
      $region10: #{tpu_custom_call.1} parent=5 // pred_check_branch
        %137 = sbr.rel (%p134) target = $region12
      $region11: #{tpu_custom_call.1} parent=5 // pred_region
        %s138 = ssub.s32 %s17, 1
      $region12: #{tpu_custom_call.1} parent=5 // pred_fallthru
        _
      %p139 = scmp.lt.s32.totalorder %s17, 2
      // Predicated region
      $region13: #{tpu_custom_call.1} parent=5 // pred_check
        %p140 = pneg %p139
      $region14: #{tpu_custom_call.1} parent=5 // pred_check_branch
        %142 = sbr.rel (%p140) target = $region16
      $region15: #{tpu_custom_call.1} parent=5 // pred_region
        // Predicated region
        $region17: #{tpu_custom_call.1} parent=15 // pred_check
          %p143 = pneg %p60
        $region18: #{tpu_custom_call.1} parent=15 // pred_check_branch
          %145 = sbr.rel (%p143) target = $region20
        $region19: #{tpu_custom_call.1} parent=15 // pred_region
          %s146 = sand.u32 %s50, 1
          %s147 = scalar_lea.sflag [#allocation3], %s146
          %s148 = sand.u32 %s50, 1
          %s149 = smul.addr %s148, 32
          %s150 = scalar_lea.vmem [#allocation2], %s149
          %s151 = sadd.s32 %s25, %s26
          %s153 = ssub.s32 512, 512
          %154 = vsyncadd %s147, %s153
          %s155 = smul.addr %s24, 4
          %s156 = sadd.s32 %s151, %s155
          %s157 = smul.addr %s156, 128
          %s158 = scalar_lea.hbm %s0, %s157
          %s159 = sshll.u32 %s150, 4
          %s160 = int_to_ptr.vmem [resolvable:$true] %s159
          %165 = dma.hbm_to_vmem [thread:$0]  %s158, 512, %s160, %s147, 128, 128, 8
        $region20: #{tpu_custom_call.1} parent=15 // pred_fallthru
          _
        // Predicated region
        $region21: #{tpu_custom_call.1} parent=15 // pred_check
          %p166 = pneg %p90
        $region22: #{tpu_custom_call.1} parent=15 // pred_check_branch
          %168 = sbr.rel (%p166) target = $region24
        $region23: #{tpu_custom_call.1} parent=15 // pred_region
          %s169 = sand.u32 %s80, 1
          %s170 = scalar_lea.sflag [#allocation6], %s169
          %s171 = sand.u32 %s80, 1
          %s172 = smul.addr %s171, 8
          %s173 = scalar_lea.vmem [#allocation5], %s172
          %s174 = sadd.s32 %s25, %s26
          %s176 = ssub.s32 128, 128
          %177 = vsyncadd %s170, %s176
          %s178 = sadd.s32 %s174, %s24
          %s179 = smul.addr %s178, 128
          %s180 = scalar_lea.hbm %s1, %s179
          %s182 = sshll.u32 %s173, 4
          %s183 = int_to_ptr.vmem [resolvable:$true] %s182
          %185 = dma.hbm_to_vmem [thread:$0]  %s180, 128, %s183, %s170
        $region24: #{tpu_custom_call.1} parent=15 // pred_fallthru
          _
      $region16: #{tpu_custom_call.1} parent=5 // pred_fallthru
        _
      %p186 = scmp.le.s32.totalorder 1, %s17
      %p187 = scmp.lt.s32.totalorder %s17, 3
      %p188 = pnand %p186, %p187
      %p189 = pneg %p188
      // Predicated region
      $region25: #{tpu_custom_call.1} parent=5 // pred_check
        _
      $region26: #{tpu_custom_call.1} parent=5 // pred_check_branch
        %191 = sbr.rel (%p188) target = $region28
      $region27: #{tpu_custom_call.1} parent=5 // pred_region
        %s192 = ssub.s32 %s17, 1
        %s193 = sand.u32 %s53, 1
        %s194 = scalar_lea.sflag [#allocation3], %s193
        %s195 = sand.u32 %s53, 1
        %s196 = smul.addr %s195, 32
        %s197 = scalar_lea.vmem [#allocation2], %s196
        // Predicated region
        $region29: #{tpu_custom_call.1} parent=27 // pred_check
          %p198 = pneg %p66
        $region30: #{tpu_custom_call.1} parent=27 // pred_check_branch
          %200 = sbr.rel (%p198) target = $region32
        $region31: #{tpu_custom_call.1} parent=27 // pred_region
          %201 = dma.done %s194, 512
        $region32: #{tpu_custom_call.1} parent=27 // pred_fallthru
          _
        %s202 = sand.u32 %s83, 1
        %s203 = scalar_lea.sflag [#allocation6], %s202
        %s204 = sand.u32 %s83, 1
        %s205 = smul.addr %s204, 8
        %s206 = scalar_lea.vmem [#allocation5], %s205
        // Predicated region
        $region33: #{tpu_custom_call.1} parent=27 // pred_check
          %p207 = pneg %p96
        $region34: #{tpu_custom_call.1} parent=27 // pred_check_branch
          %209 = sbr.rel (%p207) target = $region36
        $region35: #{tpu_custom_call.1} parent=27 // pred_region
          %210 = dma.done %s203, 128
        $region36: #{tpu_custom_call.1} parent=27 // pred_fallthru
          _
        %s211 = sand.u32 %s53, 1
        %s212 = scalar_lea.sflag [#allocation3], %s211
        %s213 = sand.u32 %s53, 1
        %s214 = smul.addr %s213, 32
        %s215 = scalar_lea.vmem [#allocation2], %s214
        %p216 = pneg %p66
        %p217 = pneg %p63
        %s218 = sand.u32 %s83, 1
        %s219 = scalar_lea.sflag [#allocation6], %s218
        %s220 = sand.u32 %s83, 1
        %s221 = smul.addr %s220, 8
        %s222 = scalar_lea.vmem [#allocation5], %s221
        %p223 = pneg %p96
        %p224 = pneg %p93
        %p225 = pneg %p124
        %p226 = pneg %p121
        %s227 = sand.u32 %s111, 1
        %s228 = scalar_lea.sflag [#allocation4], %s227
        %s229 = sand.u32 %s111, 1
        %s230 = smul.addr %s229, 8
        %s231 = scalar_lea.vmem [#allocation7], %s230
        %s232 = sadd.s32 %s28, %s29
        %s233 = sadd.s32 %s28, %s29
        %p234 = scmp.eq.s32.totalorder %s29, 0
        // Predicated region
        $region37: #{tpu_custom_call.1} parent=27 // pred_check
          %p235 = pneg %p234
        $region38: #{tpu_custom_call.1} parent=27 // pred_check_branch
          %237 = sbr.rel (%p235) target = $region40
        $region39: #{tpu_custom_call.1} parent=27 // pred_region
          %238 = vst [vmem:[%s231] sm:$0xff] 0.0
        $region40: #{tpu_custom_call.1} parent=27 // pred_fallthru
          _
        %v239 = vld [vmem:[%s206] sm:$0xff]
        %v240 = vld [vmem:[%s197] sm:$0xff]
        %s241 = scalar_lea.vmem %s197, 8 [#allocation2]
        %v242 = vld [vmem:[%s241] sm:$0xff]
        %v243 = vmax.f32 %v240, %v242
        %s244 = scalar_lea.vmem %s197, 16 [#allocation2]
        %v245 = vld [vmem:[%s244] sm:$0xff]
        %v246 = vmax.f32 %v243, %v245
        %s247 = scalar_lea.vmem %s197, 24 [#allocation2]
        %v248 = vld [vmem:[%s247] sm:$0xff]
        %v249 = vmax.f32 %v246, %v248
        %v250 = vsub.f32 %v240, %v249
        %v251 = vmul.f32 %v250, 1.442695
        %v252 = vpow.pop %v251
        %vm253 = vcmp.eq.s32.totalorder %v239, 0
        %v254 = vsel %vm253, %v250, 0.0
        %v255 = vsub.f32 %v242, %v249
        %v256 = vmul.f32 %v255, 1.442695
        %v257 = vpow.pop %v256
        %v258 = vadd.f32 %v252, %v257
        %vm259 = vcmp.eq.s32.totalorder %v239, 1
        %v260 = vsel %vm259, %v255, %v254
        %v261 = vsub.f32 %v245, %v249
        %v262 = vmul.f32 %v261, 1.442695
        %v263 = vpow.pop %v262
        %v264 = vadd.f32 %v258, %v263
        %vm265 = vcmp.eq.s32.totalorder %v239, 2
        %v266 = vsel %vm265, %v261, %v260
        %v267 = vsub.f32 %v248, %v249
        %v268 = vmul.f32 %v267, 1.442695
        %v269 = vpow.pop %v268
        %v270 = vadd.f32 %v264, %v269
        %vm271 = vcmp.eq.s32.totalorder %v239, 3
        %v272 = vsel %vm271, %v267, %v266
        %v273 = vlog2.pop %v270
        %v274 = vmul.f32 %v273, 0.6931472
        %v275 = vsub.f32 %v272, %v274
        %v276 = vmul.f32 %v275, 1.442695
        %v277 = vpow.pop %v276
        %v278 = vsub.f32 1.0, %v277
        %v279 = vmul.f32 %v278, %v278
        %v280 = vsub.f32 0.0, %v279
        %v281 = vmul.f32 %v280, %v275
        %s282 = sadd.s32 %s28, %s29
        %s283 = smul.u32 %s282, 1024
        %v284 = vlaneseq
        %v285 = vshrl.u32 %v284, 7
        %v286 = vlaneseq
        %v287 = vand.u32 %v286, 127
        %v288 = vmul.u32 %v285, 128
        %v289 = vstv %s283
        %v290 = vadd.s32 %v289, %v288
        %v291 = vadd.s32 %v290, %v287
        %vm292 = vcmp.lt.s32.totalorder %v291, 256
        %v293 = vsel %vm292, %v281, 0.0
        %v294 = vld [vmem:[%s231] sm:$0xff]
        %v295 = vadd.f32 %v293, 0.0
        %v296 = vadd.f32 %v294, %v295
        %297 = vst [vmem:[%s231] sm:$0xff] %v296
        %s298 = sand.u32 %s111, 1
        %s299 = scalar_lea.sflag [#allocation4], %s298
        %s300 = sand.u32 %s111, 1
        %s301 = smul.addr %s300, 8
        %s302 = scalar_lea.vmem [#allocation7], %s301
        // Predicated region
        $region41: #{tpu_custom_call.1} parent=27 // pred_check
          %p303 = pneg %p121
        $region42: #{tpu_custom_call.1} parent=27 // pred_check_branch
          %305 = sbr.rel (%p303) target = $region44
        $region43: #{tpu_custom_call.1} parent=27 // pred_region
          %s307 = ssub.s32 128, 128
          %308 = vsyncadd %s299, %s307
          %s309 = sadd.s32 %s28, %s27
          %s310 = smul.addr %s309, 128
          %s311 = scalar_lea.hbm %s2, %s310
          %s313 = sshll.u32 %s302, 4
          %s314 = int_to_ptr.vmem [resolvable:$true] %s313
          %316 = dma.vmem_to_hbm [thread:$0]  %s314, 128, %s311, %s299
        $region44: #{tpu_custom_call.1} parent=27 // pred_fallthru
          _
      $region28: #{tpu_custom_call.1} parent=5 // pred_fallthru
        _
      %p317 = scmp.le.s32.totalorder 2, %s17
      // Predicated region
      $region45: #{tpu_custom_call.1} parent=5 // pred_check
        %p318 = pneg %p317
      $region46: #{tpu_custom_call.1} parent=5 // pred_check_branch
        %320 = sbr.rel (%p318) target = $region48
      $region47: #{tpu_custom_call.1} parent=5 // pred_region
        %s321 = ssub.s32 %s17, 2
        // Predicated region
        $region49: #{tpu_custom_call.1} parent=47 // pred_check
          %p322 = pneg %p127
        $region50: #{tpu_custom_call.1} parent=47 // pred_check_branch
          %324 = sbr.rel (%p322) target = $region52
        $region51: #{tpu_custom_call.1} parent=47 // pred_region
          %s325 = sand.u32 %s112, 1
          %s326 = scalar_lea.sflag [#allocation4], %s325
          %s327 = sand.u32 %s112, 1
          %s328 = smul.addr %s327, 8
          %s329 = scalar_lea.vmem [#allocation7], %s328
          %330 = dma.done %s326, 128
        $region52: #{tpu_custom_call.1} parent=47 // pred_fallthru
          _
      $region48: #{tpu_custom_call.1} parent=5 // pred_fallthru
        _
    $region6: #{tpu_custom_call.1} parent=1 // loop_footer
      %s21 = sadd.s32 1, %s17
    $region7: #{tpu_custom_call.1} parent=1 // loop_footer_branch
      %16 = sbr.rel target = $region3
    $region8: #{tpu_custom_call.1} parent=1 // loop_exit
      _
    %331 = vsyncpa [#allocation3], 1
    %s332 = scalar_lea.sflag [#allocation3], 1
    %333 = vsyncpa %s332, 1
    %334 = vsyncpa [#allocation6], 1
    %s335 = scalar_lea.sflag [#allocation6], 1
    %336 = vsyncpa %s335, 1
    %337 = vsyncpa [#allocation4], 1
    %s338 = scalar_lea.sflag [#allocation4], 1
    %339 = vsyncpa %s338, 1

</llo_original>
